<compile_context>
chip_gen: v7x
topology: tpu7x:2x2x1
jax: 0.10.0
libtpu: 0.0.40
codegen_flags: <defaults>
</compile_context>

<pallas_src>
import jax
import jax.numpy as jnp
import numpy as np
from jax.experimental import pallas as pl
from jax.experimental.pallas import tpu as pltpu

BN_EPS = 1e-5


def g_forward_kernel(z_ref,
                     w1_ref, b1_ref,
                     w2_ref, b2_ref,
                     w3_ref, b3_ref,
                     w4_ref, b4_ref,
                     wo_ref, bo_ref,
                     out_ref):
    """Fused G forward for one batch tile (BN already folded into W/b)."""
    z_dim = z_ref.shape[1]
    z = z_ref[...].astype(jnp.float32)

    # ---- fc1 on the VPU: contraction depth is only z_dim (=2) ----
    # h = relu(z @ W1 + b1) computed as z_dim broadcast FMAs (static unroll).
    h = z[:, 0:1] * w1_ref[0:1, :].astype(jnp.float32)
    for j in range(1, z_dim):
        h = h + z[:, j:j + 1] * w1_ref[j:j + 1, :].astype(jnp.float32)
    h = h + b1_ref[...].astype(jnp.float32)
    h = jnp.maximum(h, 0.0)

    # ---- fc2..fc4 on the MXU: relu(h @ Wl + bl), f32 accumulation ----
    def dense_relu(h, w_ref, b_ref):
        acc = jnp.dot(h.astype(w_ref.dtype), w_ref[...],
                      preferred_element_type=jnp.float32)
        acc = acc + b_ref[...].astype(jnp.float32)
        return jnp.maximum(acc, 0.0)

    h = dense_relu(h, w2_ref, b2_ref)
    h = dense_relu(h, w3_ref, b3_ref)
    h = dense_relu(h, w4_ref, b4_ref)

    # ---- fc_out: narrow (act_dim -> x_dim) linear head ----
    out = jnp.dot(h.astype(wo_ref.dtype), wo_ref[...],
                  preferred_element_type=jnp.float32)
    out = out + bo_ref[...].astype(jnp.float32)
    out_ref[...] = out.astype(out_ref.dtype)


def _fold_bn(w, b, gamma, beta, mean, var, eps=BN_EPS):
    """Fold eval-mode BatchNorm1d into the preceding Linear."""
    scale = gamma / jnp.sqrt(var + eps)              # (d_out,)
    w_f = w * scale[None, :]                         # (d_in, d_out)
    b_f = (b - mean) * scale + beta                  # (d_out,)
    return w_f.astype(jnp.float32), b_f.reshape(1, -1).astype(jnp.float32)


def g_forward(z, params, *, tile_n=1024, compute_dtype=jnp.float32):
    """z: (N, z_dim) float32 -> (N, x_dim) float32.

    params = (layer1, layer2, layer3, layer4, head)
      layer_l = (w:(d_in,d_out), b:(d_out,), gamma, beta, run_mean, run_var)
      head    = (w_out:(act_dim, x_dim), b_out:(x_dim,))
    """
    N, z_dim = z.shape
    l1, l2, l3, l4, (wo, bo) = params

    # Fold BN into the Linears (wrapper-side, once).
    w1, b1 = _fold_bn(*l1)
    w2, b2 = _fold_bn(*l2)
    w3, b3 = _fold_bn(*l3)
    w4, b4 = _fold_bn(*l4)
    # MXU operands may be pre-cast (e.g. bf16); accumulation stays f32.
    w2c = w2.astype(compute_dtype)
    w3c = w3.astype(compute_dtype)
    w4c = w4.astype(compute_dtype)
    woc = wo.astype(compute_dtype)
    bo2 = bo.reshape(1, -1).astype(jnp.float32)

    act_dim = w1.shape[1]
    x_dim = wo.shape[1]
    del act_dim  # (kept generic; Mosaic pads non-128-multiple lane widths)

    # ---- batch tiling: big tiles, pad N to a multiple of the tile ----
    n_pad = max(8, -(-N // 8) * 8)
    tile = min(int(tile_n), n_pad)
    tile = max(8, (tile // 8) * 8)
    n_pad = -(-n_pad // tile) * tile
    if n_pad != N:
        z = jnp.pad(z, ((0, n_pad - N), (0, 0)))

    def full(a):
        nd = a.ndim
        return pl.BlockSpec(a.shape, lambda i, _nd=nd: (0,) * _nd)

    out = pl.pallas_call(
        g_forward_kernel,
        out_shape=jax.ShapeDtypeStruct((n_pad, x_dim), jnp.float32),
        grid_spec=pltpu.PrefetchScalarGridSpec(
            num_scalar_prefetch=0,
            grid=(n_pad // tile,),
            in_specs=[
                pl.BlockSpec((tile, z_dim), lambda i: (i, 0)),   # z tile
                full(w1), full(b1),
                full(w2c), full(b2),
                full(w3c), full(b3),
                full(w4c), full(b4),
                full(woc), full(bo2),
            ],
            out_specs=pl.BlockSpec((tile, x_dim), lambda i: (i, 0)),
        ),
        compiler_params=pltpu.CompilerParams(
            dimension_semantics=("parallel",)),
    )(z, w1, b1, w2c, b2, w3c, b3, w4c, b4, woc, bo2)
    return out[:N]


def init_params(key, z_dim=2, act_dim=256, x_dim=2):
    """Deterministic synthetic params matching nn.Linear / BatchNorm1d shapes."""
    ks = list(jax.random.split(key, 26))
    it = iter(ks)

    def linear(d_in, d_out):
        w = jax.random.normal(next(it), (d_in, d_out), jnp.float32) / np.sqrt(d_in)
        b = jax.random.normal(next(it), (d_out,), jnp.float32) * 0.01
        return w, b

    def bn(d):
        gamma = 1.0 + 0.1 * jax.random.normal(next(it), (d,), jnp.float32)
        beta = 0.1 * jax.random.normal(next(it), (d,), jnp.float32)
        mean = 0.1 * jax.random.normal(next(it), (d,), jnp.float32)
        var = jnp.abs(1.0 + 0.1 * jax.random.normal(next(it), (d,), jnp.float32))
        return gamma, beta, mean, var

    def layer(d_in, d_out):
        w, b = linear(d_in, d_out)
        return (w, b) + bn(d_out)

    l1 = layer(z_dim, act_dim)
    l2 = layer(act_dim, act_dim)
    l3 = layer(act_dim, act_dim)
    l4 = layer(act_dim, act_dim)
    head = linear(act_dim, x_dim)
    return (l1, l2, l3, l4, head)


def g_forward_ref(z, params, eps=BN_EPS):
    """Plain-JAX reference: Linear + eval-mode BatchNorm1d + ReLU, x4, + head."""
    l1, l2, l3, l4, (wo, bo) = params
    h = z
    for (w, b, gamma, beta, mean, var) in (l1, l2, l3, l4):
        h = h @ w + b
        h = gamma * (h - mean) / jnp.sqrt(var + eps) + beta
        h = jnp.maximum(h, 0.0)
    return h @ wo + bo


if __name__ == "__main__":
    # Small shapes consistent with G(z_dim=2, x_dim=2); act_dim kept small.
    N, Z_DIM, ACT_DIM, X_DIM = 50, 2, 256, 2

    key = jax.random.PRNGKey(0)
    kz, kp = jax.random.split(key)
    z = jax.random.normal(kz, (N, Z_DIM), jnp.float32)
    params = init_params(kp, Z_DIM, ACT_DIM, X_DIM)

    ref = g_forward_ref(z, params)

    # Exact-precision path (f32 operands, f32 accumulation); tile_n=16 so the
    # test exercises a multi-step grid (N=50 -> padded 64 -> 4 tiles).
    out_f32 = jax.block_until_ready(
        g_forward(z, params, tile_n=16, compute_dtype=jnp.float32))
    np.testing.assert_allclose(np.asarray(out_f32), np.asarray(ref),
                               rtol=1e-4, atol=1e-4)

    # Throughput path: bf16 MXU operands with f32 accumulation (relaxed tol).
    out_bf16 = jax.block_until_ready(
        g_forward(z, params, tile_n=16, compute_dtype=jnp.bfloat16))
    np.testing.assert_allclose(np.asarray(out_bf16), np.asarray(ref),
                               rtol=0.1, atol=0.1)

    print("KERNEL_OK")
</pallas_src>

<mosaic_0001>
module attributes {stable_mosaic.version = 11 : i64} {
  func.func @g_forward_kernel(%arg0: i32, %arg1: memref<16x2xf32, #tpu.memory_space<vmem>>, %arg2: memref<2x256xf32, #tpu.memory_space<vmem>>, %arg3: memref<1x256xf32, #tpu.memory_space<vmem>>, %arg4: memref<256x256xf32, #tpu.memory_space<vmem>>, %arg5: memref<1x256xf32, #tpu.memory_space<vmem>>, %arg6: memref<256x256xf32, #tpu.memory_space<vmem>>, %arg7: memref<1x256xf32, #tpu.memory_space<vmem>>, %arg8: memref<256x256xf32, #tpu.memory_space<vmem>>, %arg9: memref<1x256xf32, #tpu.memory_space<vmem>>, %arg10: memref<256x2xf32, #tpu.memory_space<vmem>>, %arg11: memref<1x2xf32, #tpu.memory_space<vmem>>, %arg12: memref<16x2xf32, #tpu.memory_space<vmem>>) attributes {dimension_semantics = [#tpu.dimension_semantics<parallel>], iteration_bounds = array<i64: 4>, scalar_prefetch = 0 : i64, scratch_operands = 0 : i64, tpu.core_type = #tpu.core_type<tc>, window_params = [{transform_indices = @transform_0, window_bounds = array<i64: 16, 2>}, {pipeline_mode = #tpu.pipeline_mode<synchronous>, transform_indices = @transform_1, window_bounds = array<i64: 2, 256>}, {pipeline_mode = #tpu.pipeline_mode<synchronous>, transform_indices = @transform_2, window_bounds = array<i64: 1, 256>}, {pipeline_mode = #tpu.pipeline_mode<synchronous>, transform_indices = @transform_3, window_bounds = array<i64: 256, 256>}, {pipeline_mode = #tpu.pipeline_mode<synchronous>, transform_indices = @transform_4, window_bounds = array<i64: 1, 256>}, {pipeline_mode = #tpu.pipeline_mode<synchronous>, transform_indices = @transform_5, window_bounds = array<i64: 256, 256>}, {pipeline_mode = #tpu.pipeline_mode<synchronous>, transform_indices = @transform_6, window_bounds = array<i64: 1, 256>}, {pipeline_mode = #tpu.pipeline_mode<synchronous>, transform_indices = @transform_7, window_bounds = array<i64: 256, 256>}, {pipeline_mode = #tpu.pipeline_mode<synchronous>, transform_indices = @transform_8, window_bounds = array<i64: 1, 256>}, {pipeline_mode = #tpu.pipeline_mode<synchronous>, transform_indices = @transform_9, window_bounds = array<i64: 256, 2>}, {pipeline_mode = #tpu.pipeline_mode<synchronous>, transform_indices = @transform_10, window_bounds = array<i64: 1, 2>}, {transform_indices = @transform_11, window_bounds = array<i64: 16, 2>}]} {
    %c0 = arith.constant 0 : index
    %c0_0 = arith.constant 0 : index
    %0 = vector.load %arg1[%c0, %c0_0] : memref<16x2xf32, #tpu.memory_space<vmem>>, vector<16x2xf32>
    %1 = vector.extract_strided_slice %0 {offsets = [0, 0], sizes = [16, 1], strides = [1, 1]} : vector<16x2xf32> to vector<16x1xf32>
    %c0_1 = arith.constant 0 : index
    %c0_2 = arith.constant 0 : index
    %2 = vector.load %arg2[%c0_1, %c0_2] : memref<2x256xf32, #tpu.memory_space<vmem>>, vector<1x256xf32>
    %3 = vector.broadcast %1 : vector<16x1xf32> to vector<16x256xf32>
    %4 = vector.broadcast %2 : vector<1x256xf32> to vector<16x256xf32>
    %5 = arith.mulf %3, %4 : vector<16x256xf32>
    %6 = vector.extract_strided_slice %0 {offsets = [0, 1], sizes = [16, 1], strides = [1, 1]} : vector<16x2xf32> to vector<16x1xf32>
    %c1 = arith.constant 1 : index
    %c0_3 = arith.constant 0 : index
    %7 = vector.load %arg2[%c1, %c0_3] : memref<2x256xf32, #tpu.memory_space<vmem>>, vector<1x256xf32>
    %8 = vector.broadcast %6 : vector<16x1xf32> to vector<16x256xf32>
    %9 = vector.broadcast %7 : vector<1x256xf32> to vector<16x256xf32>
    %10 = arith.mulf %8, %9 : vector<16x256xf32>
    %11 = arith.addf %5, %10 : vector<16x256xf32>
    %c0_4 = arith.constant 0 : index
    %c0_5 = arith.constant 0 : index
    %12 = vector.load %arg3[%c0_4, %c0_5] : memref<1x256xf32, #tpu.memory_space<vmem>>, vector<1x256xf32>
    %13 = vector.broadcast %12 : vector<1x256xf32> to vector<16x256xf32>
    %14 = arith.addf %11, %13 : vector<16x256xf32>
    %cst = arith.constant 0.000000e+00 : f32
    %15 = vector.broadcast %cst : f32 to vector<16x256xf32>
    %16 = arith.maximumf %14, %15 : vector<16x256xf32>
    %c0_6 = arith.constant 0 : index
    %c0_7 = arith.constant 0 : index
    %17 = vector.load %arg4[%c0_6, %c0_7] : memref<256x256xf32, #tpu.memory_space<vmem>>, vector<256x256xf32>
    %cst_8 = arith.constant dense<0.000000e+00> : vector<16x256xf32>
    %18 = tpu.matmul %16, %17, %cst_8 {dimension_numbers = #tpu.dot_dimension_numbers<[1], [0], [0], [1], [0, 0, 1, 1], [], []>} : vector<16x256xf32>, vector<256x256xf32>, vector<16x256xf32> -> vector<16x256xf32>
    %c0_9 = arith.constant 0 : index
    %c0_10 = arith.constant 0 : index
    %19 = vector.load %arg5[%c0_9, %c0_10] : memref<1x256xf32, #tpu.memory_space<vmem>>, vector<1x256xf32>
    %20 = vector.broadcast %19 : vector<1x256xf32> to vector<16x256xf32>
    %21 = arith.addf %18, %20 : vector<16x256xf32>
    %cst_11 = arith.constant 0.000000e+00 : f32
    %22 = vector.broadcast %cst_11 : f32 to vector<16x256xf32>
    %23 = arith.maximumf %21, %22 : vector<16x256xf32>
    %c0_12 = arith.constant 0 : index
    %c0_13 = arith.constant 0 : index
    %24 = vector.load %arg6[%c0_12, %c0_13] : memref<256x256xf32, #tpu.memory_space<vmem>>, vector<256x256xf32>
    %cst_14 = arith.constant dense<0.000000e+00> : vector<16x256xf32>
    %25 = tpu.matmul %23, %24, %cst_14 {dimension_numbers = #tpu.dot_dimension_numbers<[1], [0], [0], [1], [0, 0, 1, 1], [], []>} : vector<16x256xf32>, vector<256x256xf32>, vector<16x256xf32> -> vector<16x256xf32>
    %c0_15 = arith.constant 0 : index
    %c0_16 = arith.constant 0 : index
    %26 = vector.load %arg7[%c0_15, %c0_16] : memref<1x256xf32, #tpu.memory_space<vmem>>, vector<1x256xf32>
    %27 = vector.broadcast %26 : vector<1x256xf32> to vector<16x256xf32>
    %28 = arith.addf %25, %27 : vector<16x256xf32>
    %cst_17 = arith.constant 0.000000e+00 : f32
    %29 = vector.broadcast %cst_17 : f32 to vector<16x256xf32>
    %30 = arith.maximumf %28, %29 : vector<16x256xf32>
    %c0_18 = arith.constant 0 : index
    %c0_19 = arith.constant 0 : index
    %31 = vector.load %arg8[%c0_18, %c0_19] : memref<256x256xf32, #tpu.memory_space<vmem>>, vector<256x256xf32>
    %cst_20 = arith.constant dense<0.000000e+00> : vector<16x256xf32>
    %32 = tpu.matmul %30, %31, %cst_20 {dimension_numbers = #tpu.dot_dimension_numbers<[1], [0], [0], [1], [0, 0, 1, 1], [], []>} : vector<16x256xf32>, vector<256x256xf32>, vector<16x256xf32> -> vector<16x256xf32>
    %c0_21 = arith.constant 0 : index
    %c0_22 = arith.constant 0 : index
    %33 = vector.load %arg9[%c0_21, %c0_22] : memref<1x256xf32, #tpu.memory_space<vmem>>, vector<1x256xf32>
    %34 = vector.broadcast %33 : vector<1x256xf32> to vector<16x256xf32>
    %35 = arith.addf %32, %34 : vector<16x256xf32>
    %cst_23 = arith.constant 0.000000e+00 : f32
    %36 = vector.broadcast %cst_23 : f32 to vector<16x256xf32>
    %37 = arith.maximumf %35, %36 : vector<16x256xf32>
    %c0_24 = arith.constant 0 : index
    %c0_25 = arith.constant 0 : index
    %38 = vector.load %arg10[%c0_24, %c0_25] : memref<256x2xf32, #tpu.memory_space<vmem>>, vector<256x2xf32>
    %cst_26 = arith.constant dense<0.000000e+00> : vector<16x2xf32>
    %39 = tpu.matmul %37, %38, %cst_26 {dimension_numbers = #tpu.dot_dimension_numbers<[1], [0], [0], [1], [0, 0, 1, 1], [], []>} : vector<16x256xf32>, vector<256x2xf32>, vector<16x2xf32> -> vector<16x2xf32>
    %c0_27 = arith.constant 0 : index
    %c0_28 = arith.constant 0 : index
    %40 = vector.load %arg11[%c0_27, %c0_28] : memref<1x2xf32, #tpu.memory_space<vmem>>, vector<1x2xf32>
    %41 = vector.broadcast %40 : vector<1x2xf32> to vector<16x2xf32>
    %42 = arith.addf %39, %41 : vector<16x2xf32>
    %c0_29 = arith.constant 0 : index
    %c0_30 = arith.constant 0 : index
    %43 = vector.load %arg12[%c0_29, %c0_30] : memref<16x2xf32, #tpu.memory_space<vmem>>, vector<16x2xf32>
    tpu.vector_store %arg12[%c0_29, %c0_30], %42 {strides = array<i32>} : memref<16x2xf32, #tpu.memory_space<vmem>>, vector<16x2xf32>,
    return
  }
  func.func @transform_0(%arg0: i32) -> (i32, i32) {
    %c0_i32 = arith.constant 0 : i32
    %c0_i32_0 = arith.constant 0 : i32
    return %arg0, %c0_i32 : i32, i32
  }
  func.func @transform_1(%arg0: i32) -> (i32, i32) {
    %c0_i32 = arith.constant 0 : i32
    %c0_i32_0 = arith.constant 0 : i32
    %c0_i32_1 = arith.constant 0 : i32
    return %c0_i32, %c0_i32_0 : i32, i32
  }
  func.func @transform_2(%arg0: i32) -> (i32, i32) {
    %c0_i32 = arith.constant 0 : i32
    %c0_i32_0 = arith.constant 0 : i32
    %c0_i32_1 = arith.constant 0 : i32
    return %c0_i32, %c0_i32_0 : i32, i32
  }
  func.func @transform_3(%arg0: i32) -> (i32, i32) {
    %c0_i32 = arith.constant 0 : i32
    %c0_i32_0 = arith.constant 0 : i32
    %c0_i32_1 = arith.constant 0 : i32
    return %c0_i32, %c0_i32_0 : i32, i32
  }
  func.func @transform_4(%arg0: i32) -> (i32, i32) {
    %c0_i32 = arith.constant 0 : i32
    %c0_i32_0 = arith.constant 0 : i32
    %c0_i32_1 = arith.constant 0 : i32
    return %c0_i32, %c0_i32_0 : i32, i32
  }
  func.func @transform_5(%arg0: i32) -> (i32, i32) {
    %c0_i32 = arith.constant 0 : i32
    %c0_i32_0 = arith.constant 0 : i32
    %c0_i32_1 = arith.constant 0 : i32
    return %c0_i32, %c0_i32_0 : i32, i32
  }
  func.func @transform_6(%arg0: i32) -> (i32, i32) {
    %c0_i32 = arith.constant 0 : i32
    %c0_i32_0 = arith.constant 0 : i32
    %c0_i32_1 = arith.constant 0 : i32
    return %c0_i32, %c0_i32_0 : i32, i32
  }
  func.func @transform_7(%arg0: i32) -> (i32, i32) {
    %c0_i32 = arith.constant 0 : i32
    %c0_i32_0 = arith.constant 0 : i32
    %c0_i32_1 = arith.constant 0 : i32
    return %c0_i32, %c0_i32_0 : i32, i32
  }
  func.func @transform_8(%arg0: i32) -> (i32, i32) {
    %c0_i32 = arith.constant 0 : i32
    %c0_i32_0 = arith.constant 0 : i32
    %c0_i32_1 = arith.constant 0 : i32
    return %c0_i32, %c0_i32_0 : i32, i32
  }
  func.func @transform_9(%arg0: i32) -> (i32, i32) {
    %c0_i32 = arith.constant 0 : i32
    %c0_i32_0 = arith.constant 0 : i32
    %c0_i32_1 = arith.constant 0 : i32
    return %c0_i32, %c0_i32_0 : i32, i32
  }
  func.func @transform_10(%arg0: i32) -> (i32, i32) {
    %c0_i32 = arith.constant 0 : i32
    %c0_i32_0 = arith.constant 0 : i32
    %c0_i32_1 = arith.constant 0 : i32
    return %c0_i32, %c0_i32_0 : i32, i32
  }
  func.func @transform_11(%arg0: i32) -> (i32, i32) {
    %c0_i32 = arith.constant 0 : i32
    %c0_i32_0 = arith.constant 0 : i32
    return %arg0, %c0_i32 : i32, i32
  }
}

</mosaic_0001>

<llo_original>
// kernel: tpu_custom_call.1
$region0: #{tpu_custom_call.1}
  #allocation0 [shape = 'u32[]', space=smem, size = 0x4, offset = 0x4, fixed_abs, tag = 'smem constant byte address 0x4 - core index']
  #allocation1 [shape = 'u32[144,128]{1,0:T(1,128)}', space=vmem, size = 0x12000, scoped, tag = 'internal scratch']
  %s0 = inlined_call_operand.vmem [shape: f32[64,2], index: 0, kind: input, shape index: {}]
  %s1 = inlined_call_operand.vmem [shape: f32[2,256], index: 1, kind: input, shape index: {}]
  %s2 = inlined_call_operand.vmem [shape: f32[1,256], index: 2, kind: input, shape index: {}]
  %s3 = inlined_call_operand.hbm [shape: f32[256,256], index: 3, kind: input, shape index: {}]
  %s4 = inlined_call_operand.vmem [shape: f32[1,256], index: 4, kind: input, shape index: {}]
  %s5 = inlined_call_operand.hbm [shape: f32[256,256], index: 5, kind: input, shape index: {}]
  %s6 = inlined_call_operand.vmem [shape: f32[1,256], index: 6, kind: input, shape index: {}]
  %s7 = inlined_call_operand.hbm [shape: f32[256,256], index: 7, kind: input, shape index: {}]
  %s8 = inlined_call_operand.vmem [shape: f32[1,256], index: 8, kind: input, shape index: {}]
  %s9 = inlined_call_operand.vmem [shape: f32[256,2], index: 9, kind: input, shape index: {}]
  %s10 = inlined_call_operand.vmem [shape: f32[1,2], index: 10, kind: input, shape index: {}]
  %s11 = inlined_call_operand.vmem [shape: f32[64,2], index: 11, kind: output, shape index: {}]
  %s12 = sld [smem:[#allocation0]]
  $region89: #{tpu_custom_call.1} parent=0
    _
  %s14 = ssub.s32 1, %s12
  %s15 = scalar_select 0, %s14, %s12
  $region1: #{tpu_custom_call.1} parent=0
    #allocation2 [shape = 'u8[262144]{0}', space=vmem, size = 0x40000, scoped, tag = 'input window, operand 3, single buffered']
    #allocation3 [shape = 's32[2]{0}', space=sflag, size = 0x8, scoped, tag = 'scoped memory for tpu_custom_call.1']
    #allocation4 [shape = 'u8[262144]{0}', space=vmem, size = 0x40000, scoped, tag = 'input window, operand 5, single buffered']
    #allocation5 [shape = 's32[1]{0}', space=sflag, size = 0x4, scoped, tag = 'scoped memory for tpu_custom_call.1']
    #allocation6 [shape = 'u8[262144]{0}', space=vmem, size = 0x40000, scoped, tag = 'input window, operand 7, single buffered']
    %16 = vsyncpa [#allocation3], 0
    %17 = vsyncpa [#allocation5], 0
    loop: start=0, step=1, limit=6
    $region2: #{tpu_custom_call.1} parent=1 // loop_pre_header
      _
    $region3: #{tpu_custom_call.1} parent=1 // loop_header
      %s19 = sphi 0, %s23
      %p20 = scmp.ge.s32.totalorder %s19, 6
      %s29 = sphi 0, %s31
      %s32 = sphi 0, %s29
      %s33 = sphi 0, %s32
      %s49 = sphi 0, %s33
      %s53 = sphi 0, %s53
      %s55 = sphi 0, %s53
      %s56 = sphi 0, %s55
      %s70 = sphi 0, %s56
      %s74 = sphi 0, %s74
      %s76 = sphi 0, %s74
      %s77 = sphi 0, %s76
      %s91 = sphi 0, %s77
      %s95 = sphi 0, %s95
      %s97 = sphi 0, %s95
      %s98 = sphi 0, %s97
      %s112 = sphi 0, %s98
      %s116 = sphi 0, %s116
      %s118 = sphi 0, %s116
      %s119 = sphi 0, %s118
      %s133 = sphi 0, %s119
      %s137 = sphi 0, %s137
      %s139 = sphi 0, %s137
      %s140 = sphi 0, %s139
      %s154 = sphi 0, %s140
      %s158 = sphi 0, %s158
      %s160 = sphi 0, %s158
      %s161 = sphi 0, %s160
      %s175 = sphi 0, %s161
      %s179 = sphi 0, %s179
      %s181 = sphi 0, %s179
      %s182 = sphi 0, %s181
      %s196 = sphi 0, %s182
      %s200 = sphi 0, %s200
      %s202 = sphi 0, %s200
      %s203 = sphi 0, %s202
      %s217 = sphi 0, %s203
      %s221 = sphi 0, %s221
      %s223 = sphi 0, %s221
      %s224 = sphi 0, %s223
      %s238 = sphi 0, %s224
      %s242 = sphi 0, %s242
      %s244 = sphi 0, %s242
      %s245 = sphi 0, %s244
      %s259 = sphi 0, %s245
      %s265 = sphi 0, %s267
      %s268 = sphi 0, %s265
      %s269 = sphi 0, %s268
      %s285 = sphi 0, %s269
    $region4: #{tpu_custom_call.1} parent=1 // loop_header_branch
      %22 = sbr.rel (%p20) target = $region8
    $region5: #{tpu_custom_call.1} parent=1 // loop_body
      %s24 = ssub.s32 %s19, 1
      %s25 = ssub.s32 %s19, 2
      %s26 = sadd.s32 %s19, 1
      %s27 = ssub.s32 %s19, %s26
      %p28 = scmp.eq.s32.totalorder %s27, 0
      %s30 = sadd.s32 %s29, 1
      %s31 = scalar_select %p28, %s29, %s30
      %p34 = pneg %p28
      %p35 = scmp.eq.s32.totalorder %s19, 3
      %p36 = por %p34, %p35
      %p37 = scmp.ne.s32.totalorder %s29, %s32
      %p38 = scmp.eq.s32.totalorder %s19, 0
      %p39 = por %p37, %p38
      %p40 = scmp.ne.s32.totalorder %s29, %s32
      %p41 = scmp.eq.s32.totalorder %s24, 3
      %p42 = por %p40, %p41
      %p43 = scmp.ne.s32.totalorder %s32, %s33
      %p44 = scmp.eq.s32.totalorder %s24, 0
      %p45 = por %p43, %p44
      %p46 = scmp.ne.s32.totalorder %s32, %s33
      %p47 = scmp.eq.s32.totalorder %s25, 3
      %p48 = por %p46, %p47
      %p50 = scmp.ne.s32.totalorder %s33, %s49
      %p51 = scmp.eq.s32.totalorder %s25, 0
      %p52 = por %p50, %p51
      %s54 = sadd.s32 %s53, 1
      %p57 = scmp.eq.s32.totalorder %s19, 3
      %p58 = scmp.ne.s32.totalorder %s53, %s55
      %p59 = scmp.eq.s32.totalorder %s19, 0
      %p60 = por %p58, %p59
      %p61 = scmp.ne.s32.totalorder %s53, %s55
      %p62 = scmp.eq.s32.totalorder %s24, 3
      %p63 = por %p61, %p62
      %p64 = scmp.ne.s32.totalorder %s55, %s56
      %p65 = scmp.eq.s32.totalorder %s24, 0
      %p66 = por %p64, %p65
      %p67 = scmp.ne.s32.totalorder %s55, %s56
      %p68 = scmp.eq.s32.totalorder %s25, 3
      %p69 = por %p67, %p68
      %p71 = scmp.ne.s32.totalorder %s56, %s70
      %p72 = scmp.eq.s32.totalorder %s25, 0
      %p73 = por %p71, %p72
      %s75 = sadd.s32 %s74, 1
      %p78 = scmp.eq.s32.totalorder %s19, 3
      %p79 = scmp.ne.s32.totalorder %s74, %s76
      %p80 = scmp.eq.s32.totalorder %s19, 0
      %p81 = por %p79, %p80
      %p82 = scmp.ne.s32.totalorder %s74, %s76
      %p83 = scmp.eq.s32.totalorder %s24, 3
      %p84 = por %p82, %p83
      %p85 = scmp.ne.s32.totalorder %s76, %s77
      %p86 = scmp.eq.s32.totalorder %s24, 0
      %p87 = por %p85, %p86
      %p88 = scmp.ne.s32.totalorder %s76, %s77
      %p89 = scmp.eq.s32.totalorder %s25, 3
      %p90 = por %p88, %p89
      %p92 = scmp.ne.s32.totalorder %s77, %s91
      %p93 = scmp.eq.s32.totalorder %s25, 0
      %p94 = por %p92, %p93
      %s96 = sadd.s32 %s95, 1
      %p99 = scmp.eq.s32.totalorder %s19, 3
      %p100 = scmp.ne.s32.totalorder %s95, %s97
      %p101 = scmp.eq.s32.totalorder %s19, 0
      %p102 = por %p100, %p101
      %p103 = scmp.ne.s32.totalorder %s95, %s97
      %p104 = scmp.eq.s32.totalorder %s24, 3
      %p105 = por %p103, %p104
      %p106 = scmp.ne.s32.totalorder %s97, %s98
      %p107 = scmp.eq.s32.totalorder %s24, 0
      %p108 = por %p106, %p107
      %p109 = scmp.ne.s32.totalorder %s97, %s98
      %p110 = scmp.eq.s32.totalorder %s25, 3
      %p111 = por %p109, %p110
      %p113 = scmp.ne.s32.totalorder %s98, %s112
      %p114 = scmp.eq.s32.totalorder %s25, 0
      %p115 = por %p113, %p114
      %s117 = sadd.s32 %s116, 1
      %p120 = scmp.eq.s32.totalorder %s19, 3
      %p121 = scmp.ne.s32.totalorder %s116, %s118
      %p122 = scmp.eq.s32.totalorder %s19, 0
      %p123 = por %p121, %p122
      %p124 = scmp.ne.s32.totalorder %s116, %s118
      %p125 = scmp.eq.s32.totalorder %s24, 3
      %p126 = por %p124, %p125
      %p127 = scmp.ne.s32.totalorder %s118, %s119
      %p128 = scmp.eq.s32.totalorder %s24, 0
      %p129 = por %p127, %p128
      %p130 = scmp.ne.s32.totalorder %s118, %s119
      %p131 = scmp.eq.s32.totalorder %s25, 3
      %p132 = por %p130, %p131
      %p134 = scmp.ne.s32.totalorder %s119, %s133
      %p135 = scmp.eq.s32.totalorder %s25, 0
      %p136 = por %p134, %p135
      %s138 = sadd.s32 %s137, 1
      %p141 = scmp.eq.s32.totalorder %s19, 3
      %p142 = scmp.ne.s32.totalorder %s137, %s139
      %p143 = scmp.eq.s32.totalorder %s19, 0
      %p144 = por %p142, %p143
      %p145 = scmp.ne.s32.totalorder %s137, %s139
      %p146 = scmp.eq.s32.totalorder %s24, 3
      %p147 = por %p145, %p146
      %p148 = scmp.ne.s32.totalorder %s139, %s140
      %p149 = scmp.eq.s32.totalorder %s24, 0
      %p150 = por %p148, %p149
      %p151 = scmp.ne.s32.totalorder %s139, %s140
      %p152 = scmp.eq.s32.totalorder %s25, 3
      %p153 = por %p151, %p152
      %p155 = scmp.ne.s32.totalorder %s140, %s154
      %p156 = scmp.eq.s32.totalorder %s25, 0
      %p157 = por %p155, %p156
      %s159 = sadd.s32 %s158, 1
      %p162 = scmp.eq.s32.totalorder %s19, 3
      %p163 = scmp.ne.s32.totalorder %s158, %s160
      %p164 = scmp.eq.s32.totalorder %s19, 0
      %p165 = por %p163, %p164
      %p166 = scmp.ne.s32.totalorder %s158, %s160
      %p167 = scmp.eq.s32.totalorder %s24, 3
      %p168 = por %p166, %p167
      %p169 = scmp.ne.s32.totalorder %s160, %s161
      %p170 = scmp.eq.s32.totalorder %s24, 0
      %p171 = por %p169, %p170
      %p172 = scmp.ne.s32.totalorder %s160, %s161
      %p173 = scmp.eq.s32.totalorder %s25, 3
      %p174 = por %p172, %p173
      %p176 = scmp.ne.s32.totalorder %s161, %s175
      %p177 = scmp.eq.s32.totalorder %s25, 0
      %p178 = por %p176, %p177
      %s180 = sadd.s32 %s179, 1
      %p183 = scmp.eq.s32.totalorder %s19, 3
      %p184 = scmp.ne.s32.totalorder %s179, %s181
      %p185 = scmp.eq.s32.totalorder %s19, 0
      %p186 = por %p184, %p185
      %p187 = scmp.ne.s32.totalorder %s179, %s181
      %p188 = scmp.eq.s32.totalorder %s24, 3
      %p189 = por %p187, %p188
      %p190 = scmp.ne.s32.totalorder %s181, %s182
      %p191 = scmp.eq.s32.totalorder %s24, 0
      %p192 = por %p190, %p191
      %p193 = scmp.ne.s32.totalorder %s181, %s182
      %p194 = scmp.eq.s32.totalorder %s25, 3
      %p195 = por %p193, %p194
      %p197 = scmp.ne.s32.totalorder %s182, %s196
      %p198 = scmp.eq.s32.totalorder %s25, 0
      %p199 = por %p197, %p198
      %s201 = sadd.s32 %s200, 1
      %p204 = scmp.eq.s32.totalorder %s19, 3
      %p205 = scmp.ne.s32.totalorder %s200, %s202
      %p206 = scmp.eq.s32.totalorder %s19, 0
      %p207 = por %p205, %p206
      %p208 = scmp.ne.s32.totalorder %s200, %s202
      %p209 = scmp.eq.s32.totalorder %s24, 3
      %p210 = por %p208, %p209
      %p211 = scmp.ne.s32.totalorder %s202, %s203
      %p212 = scmp.eq.s32.totalorder %s24, 0
      %p213 = por %p211, %p212
      %p214 = scmp.ne.s32.totalorder %s202, %s203
      %p215 = scmp.eq.s32.totalorder %s25, 3
      %p216 = por %p214, %p215
      %p218 = scmp.ne.s32.totalorder %s203, %s217
      %p219 = scmp.eq.s32.totalorder %s25, 0
      %p220 = por %p218, %p219
      %s222 = sadd.s32 %s221, 1
      %p225 = scmp.eq.s32.totalorder %s19, 3
      %p226 = scmp.ne.s32.totalorder %s221, %s223
      %p227 = scmp.eq.s32.totalorder %s19, 0
      %p228 = por %p226, %p227
      %p229 = scmp.ne.s32.totalorder %s221, %s223
      %p230 = scmp.eq.s32.totalorder %s24, 3
      %p231 = por %p229, %p230
      %p232 = scmp.ne.s32.totalorder %s223, %s224
      %p233 = scmp.eq.s32.totalorder %s24, 0
      %p234 = por %p232, %p233
      %p235 = scmp.ne.s32.totalorder %s223, %s224
      %p236 = scmp.eq.s32.totalorder %s25, 3
      %p237 = por %p235, %p236
      %p239 = scmp.ne.s32.totalorder %s224, %s238
      %p240 = scmp.eq.s32.totalorder %s25, 0
      %p241 = por %p239, %p240
      %s243 = sadd.s32 %s242, 1
      %p246 = scmp.eq.s32.totalorder %s19, 3
      %p247 = scmp.ne.s32.totalorder %s242, %s244
      %p248 = scmp.eq.s32.totalorder %s19, 0
      %p249 = por %p247, %p248
      %p250 = scmp.ne.s32.totalorder %s242, %s244
      %p251 = scmp.eq.s32.totalorder %s24, 3
      %p252 = por %p250, %p251
      %p253 = scmp.ne.s32.totalorder %s244, %s245
      %p254 = scmp.eq.s32.totalorder %s24, 0
      %p255 = por %p253, %p254
      %p256 = scmp.ne.s32.totalorder %s244, %s245
      %p257 = scmp.eq.s32.totalorder %s25, 3
      %p258 = por %p256, %p257
      %p260 = scmp.ne.s32.totalorder %s245, %s259
      %p261 = scmp.eq.s32.totalorder %s25, 0
      %p262 = por %p260, %p261
      %s263 = ssub.s32 %s19, %s26
      %p264 = scmp.eq.s32.totalorder %s263, 0
      %s266 = sadd.s32 %s265, 1
      %s267 = scalar_select %p264, %s265, %s266
      %p270 = pneg %p264
      %p271 = scmp.eq.s32.totalorder %s19, 3
      %p272 = por %p270, %p271
      %p273 = scmp.ne.s32.totalorder %s265, %s268
      %p274 = scmp.eq.s32.totalorder %s19, 0
      %p275 = por %p273, %p274
      %p276 = scmp.ne.s32.totalorder %s265, %s268
      %p277 = scmp.eq.s32.totalorder %s24, 3
      %p278 = por %p276, %p277
      %p279 = scmp.ne.s32.totalorder %s268, %s269
      %p280 = scmp.eq.s32.totalorder %s24, 0
      %p281 = por %p279, %p280
      %p282 = scmp.ne.s32.totalorder %s268, %s269
      %p283 = scmp.eq.s32.totalorder %s25, 3
      %p284 = por %p282, %p283
      %p286 = scmp.ne.s32.totalorder %s269, %s285
      %p287 = scmp.eq.s32.totalorder %s25, 0
      %p288 = por %p286, %p287
      %p289 = scmp.le.s32.totalorder 1, %s19
      %p290 = scmp.lt.s32.totalorder %s19, 5
      %p291 = pnand %p289, %p290
      %p292 = pneg %p291
      // Predicated region
      $region9: #{tpu_custom_call.1} parent=5 // pred_check
        _
      $region10: #{tpu_custom_call.1} parent=5 // pred_check_branch
        %294 = sbr.rel (%p291) target = $region12
      $region11: #{tpu_custom_call.1} parent=5 // pred_region
        %s295 = ssub.s32 %s19, 1
        // Predicated region
        $region13: #{tpu_custom_call.1} parent=11 // pred_check
          %p296 = pneg %p66
        $region14: #{tpu_custom_call.1} parent=11 // pred_check_branch
          %298 = sbr.rel (%p296) target = $region16
        $region15: #{tpu_custom_call.1} parent=11 // pred_region
          _
        $region16: #{tpu_custom_call.1} parent=11 // pred_fallthru
          _
        // Predicated region
        $region17: #{tpu_custom_call.1} parent=11 // pred_check
          %p299 = pneg %p87
        $region18: #{tpu_custom_call.1} parent=11 // pred_check_branch
          %301 = sbr.rel (%p299) target = $region20
        $region19: #{tpu_custom_call.1} parent=11 // pred_region
          _
        $region20: #{tpu_custom_call.1} parent=11 // pred_fallthru
          _
        // Predicated region
        $region21: #{tpu_custom_call.1} parent=11 // pred_check
          %p302 = pneg %p108
        $region22: #{tpu_custom_call.1} parent=11 // pred_check_branch
          %304 = sbr.rel (%p302) target = $region24
        $region23: #{tpu_custom_call.1} parent=11 // pred_region
          %s306 = ssub.s32 8192, 8192
          %307 = vsyncadd [#allocation3], %s306
          %s308 = sshll.u32 [#allocation2], 4
          %s309 = int_to_ptr.vmem [resolvable:$true] %s308
          %314 = dma.hbm_to_vmem [thread:$0]  %s3, 8192, %s309, [#allocation3], 256, 256, 16
        $region24: #{tpu_custom_call.1} parent=11 // pred_fallthru
          _
        // Predicated region
        $region25: #{tpu_custom_call.1} parent=11 // pred_check
          %p315 = pneg %p129
        $region26: #{tpu_custom_call.1} parent=11 // pred_check_branch
          %317 = sbr.rel (%p315) target = $region28
        $region27: #{tpu_custom_call.1} parent=11 // pred_region
          _
        $region28: #{tpu_custom_call.1} parent=11 // pred_fallthru
          _
        // Predicated region
        $region29: #{tpu_custom_call.1} parent=11 // pred_check
          %p318 = pneg %p150
        $region30: #{tpu_custom_call.1} parent=11 // pred_check_branch
          %320 = sbr.rel (%p318) target = $region32
        $region31: #{tpu_custom_call.1} parent=11 // pred_region
          %s322 = ssub.s32 8192, 8192
          %323 = vsyncadd [#allocation5], %s322
          %s324 = sshll.u32 [#allocation4], 4
          %s325 = int_to_ptr.vmem [resolvable:$true] %s324
          %330 = dma.hbm_to_vmem [thread:$0]  %s5, 8192, %s325, [#allocation5], 256, 256, 16
        $region32: #{tpu_custom_call.1} parent=11 // pred_fallthru
          _
        // Predicated region
        $region33: #{tpu_custom_call.1} parent=11 // pred_check
          %p331 = pneg %p171
        $region34: #{tpu_custom_call.1} parent=11 // pred_check_branch
          %333 = sbr.rel (%p331) target = $region36
        $region35: #{tpu_custom_call.1} parent=11 // pred_region
          _
        $region36: #{tpu_custom_call.1} parent=11 // pred_fallthru
          _
        // Predicated region
        $region37: #{tpu_custom_call.1} parent=11 // pred_check
          %p334 = pneg %p192
        $region38: #{tpu_custom_call.1} parent=11 // pred_check_branch
          %336 = sbr.rel (%p334) target = $region40
        $region39: #{tpu_custom_call.1} parent=11 // pred_region
          %s338 = ssub.s32 8192, 8192
          %339 = vsyncadd [#allocation5], %s338
          %s340 = sshll.u32 [#allocation6], 4
          %s341 = int_to_ptr.vmem [resolvable:$true] %s340
          %346 = dma.hbm_to_vmem [thread:$0]  %s7, 8192, %s341, [#allocation5], 256, 256, 16
        $region40: #{tpu_custom_call.1} parent=11 // pred_fallthru
          _
        // Predicated region
        $region41: #{tpu_custom_call.1} parent=11 // pred_check
          %p347 = pneg %p213
        $region42: #{tpu_custom_call.1} parent=11 // pred_check_branch
          %349 = sbr.rel (%p347) target = $region44
        $region43: #{tpu_custom_call.1} parent=11 // pred_region
          _
        $region44: #{tpu_custom_call.1} parent=11 // pred_fallthru
          _
        // Predicated region
        $region45: #{tpu_custom_call.1} parent=11 // pred_check
          %p350 = pneg %p234
        $region46: #{tpu_custom_call.1} parent=11 // pred_check_branch
          %352 = sbr.rel (%p350) target = $region48
        $region47: #{tpu_custom_call.1} parent=11 // pred_region
          _
        $region48: #{tpu_custom_call.1} parent=11 // pred_fallthru
          _
        // Predicated region
        $region49: #{tpu_custom_call.1} parent=11 // pred_check
          %p353 = pneg %p255
        $region50: #{tpu_custom_call.1} parent=11 // pred_check_branch
          %355 = sbr.rel (%p353) target = $region52
        $region51: #{tpu_custom_call.1} parent=11 // pred_region
          _
        $region52: #{tpu_custom_call.1} parent=11 // pred_fallthru
          _
      $region12: #{tpu_custom_call.1} parent=5 // pred_fallthru
        _
      %p356 = scmp.lt.s32.totalorder %s19, 4
      // Predicated region
      $region53: #{tpu_custom_call.1} parent=5 // pred_check
        %p357 = pneg %p356
      $region54: #{tpu_custom_call.1} parent=5 // pred_check_branch
        %359 = sbr.rel (%p357) target = $region56
      $region55: #{tpu_custom_call.1} parent=5 // pred_region
        // Predicated region
        $region57: #{tpu_custom_call.1} parent=55 // pred_check
          %p360 = pneg %p39
        $region58: #{tpu_custom_call.1} parent=55 // pred_check_branch
          %362 = sbr.rel (%p360) target = $region60
        $region59: #{tpu_custom_call.1} parent=55 // pred_region
          %s363 = smul.u32 2, %s19
          %p364 = scmp.lt.s32.totalorder %s363, 7
          %s365 = scalar_select %p364, %s363, 7
          %s366 = smul.addr %s365, 8
          %s367 = scalar_lea.vmem %s0, %s366
          %s368 = smul.u32 2, %s19
        $region60: #{tpu_custom_call.1} parent=55 // pred_fallthru
          _
      $region56: #{tpu_custom_call.1} parent=5 // pred_fallthru
        _
      %p369 = scmp.le.s32.totalorder 1, %s19
      %p370 = scmp.lt.s32.totalorder %s19, 5
      %p371 = pnand %p369, %p370
      %p372 = pneg %p371
      // Predicated region
      $region61: #{tpu_custom_call.1} parent=5 // pred_check
        _
      $region62: #{tpu_custom_call.1} parent=5 // pred_check_branch
        %374 = sbr.rel (%p371) target = $region64
      $region63: #{tpu_custom_call.1} parent=5 // pred_region
        %s375 = ssub.s32 %s19, 1
        // Predicated region
        $region65: #{tpu_custom_call.1} parent=63 // pred_check
          %p376 = pneg %p108
        $region66: #{tpu_custom_call.1} parent=63 // pred_check_branch
          %378 = sbr.rel (%p376) target = $region68
        $region67: #{tpu_custom_call.1} parent=63 // pred_region
          %379 = dma.done [#allocation3], 8192
        $region68: #{tpu_custom_call.1} parent=63 // pred_fallthru
          _
        // Predicated region
        $region69: #{tpu_custom_call.1} parent=63 // pred_check
          %p380 = pneg %p150
        $region70: #{tpu_custom_call.1} parent=63 // pred_check_branch
          %382 = sbr.rel (%p380) target = $region72
        $region71: #{tpu_custom_call.1} parent=63 // pred_region
          %383 = dma.done [#allocation5], 8192
        $region72: #{tpu_custom_call.1} parent=63 // pred_fallthru
          _
        // Predicated region
        $region73: #{tpu_custom_call.1} parent=63 // pred_check
          %p384 = pneg %p192
        $region74: #{tpu_custom_call.1} parent=63 // pred_check_branch
          %386 = sbr.rel (%p384) target = $region76
        $region75: #{tpu_custom_call.1} parent=63 // pred_region
          %387 = dma.done [#allocation5], 8192
        $region76: #{tpu_custom_call.1} parent=63 // pred_fallthru
          _
        %s388 = smul.u32 2, %s24
        %p389 = scmp.lt.s32.totalorder %s388, 7
        %s390 = scalar_select %p389, %s388, 7
        %s391 = smul.addr %s390, 8
        %s392 = scalar_lea.vmem %s0, %s391
        %p393 = pneg %p45
        %p394 = pneg %p42
        %p395 = pneg %p66
        %p396 = pneg %p63
        %p397 = pneg %p87
        %p398 = pneg %p84
        %p399 = pneg %p108
        %p400 = pneg %p105
        %p401 = pneg %p129
        %p402 = pneg %p126
        %p403 = pneg %p150
        %p404 = pneg %p147
        %p405 = pneg %p171
        %p406 = pneg %p168
        %p407 = pneg %p192
        %p408 = pneg %p189
        %p409 = pneg %p213
        %p410 = pneg %p210
        %p411 = pneg %p234
        %p412 = pneg %p231
        %p413 = pneg %p255
        %p414 = pneg %p252
        %p415 = pneg %p281
        %p416 = pneg %p278
        %s417 = smul.u32 2, %s24
        %p418 = scmp.lt.s32.totalorder %s417, 7
        %s419 = scalar_select %p418, %s417, 7
        %s420 = smul.addr %s419, 8
        %s421 = scalar_lea.vmem %s11, %s420
        %s422 = smul.u32 2, %s24
        %p423 = scmp.lt.s32.totalorder %s422, 7
        %s424 = scalar_select %p423, %s422, 7
        %s425 = smul.addr %s424, 8
        %s426 = scalar_lea.vmem %s0, %s425
        %s427 = smul.u32 2, %s24
        %s428 = smul.u32 2, %s24
        %p429 = scmp.lt.s32.totalorder %s428, 7
        %s430 = scalar_select %p429, %s428, 7
        %s431 = smul.addr %s430, 8
        %s432 = scalar_lea.vmem %s11, %s431
        %s433 = smul.u32 2, %s24
        %v434 = vld [vmem:[%s426] sm:$0xff]
        %v435 = vld [vmem:[%s426 + $0x8] sm:$0xff]
        %v436 = vld [vmem:[%s1] ss:$2 sm:$0x3]
        %438 = vset.pattern.permute.xlu0 0
        %439 = vperm.xlu0 %438, %v434
        %v440 = vpop.permute.xlu0 %439
        %443 = vset.pattern.permute.xlu0 0
        %444 = vperm.xlu0 %443, %v435
        %v445 = vpop.permute.xlu0 %444
        %v448 = vlaneseq
        %v449 = vshrl.u32 %v448, 7
        %v450 = vsub.s32 0, %v449
        %v451 = vrot.slane %v436, %v450
        %v452 = vlaneseq
        %v453 = vshrl.u32 %v452, 7
        %v454 = vsub.s32 1, %v453
        %v455 = vrot.slane %v436, %v454
        %v458 = vmul.f32 %v440, %v451
        %v459 = vmul.f32 %v440, %v455
        %v460 = vmul.f32 %v445, %v451
        %v461 = vmul.f32 %v445, %v455
        %s462 = scalar_lea.vmem %s1, 1
        %v463 = vld [vmem:[%s462] ss:$2 sm:$0x3]
        %464 = vset.pattern.permute.xlu0 1
        %465 = vperm.xlu0 %464, %v434
        %v466 = vpop.permute.xlu0 %465
        %468 = vset.pattern.permute.xlu0 1
        %469 = vperm.xlu0 %468, %v435
        %v470 = vpop.permute.xlu0 %469
        %v473 = vlaneseq
        %v474 = vshrl.u32 %v473, 7
        %v475 = vsub.s32 0, %v474
        %v476 = vrot.slane %v463, %v475
        %v477 = vlaneseq
        %v478 = vshrl.u32 %v477, 7
        %v479 = vsub.s32 1, %v478
        %v480 = vrot.slane %v463, %v479
        %v483 = vmul.f32 %v466, %v476
        %v484 = vmul.f32 %v466, %v480
        %v485 = vmul.f32 %v470, %v476
        %v486 = vmul.f32 %v470, %v480
        %v487 = vadd.f32 %v458, %v483
        %v488 = vadd.f32 %v459, %v484
        %v489 = vadd.f32 %v460, %v485
        %v490 = vadd.f32 %v461, %v486
        %v491 = vld [vmem:[%s2] sm:$0x3]
        %v493 = vlaneseq
        %v494 = vshrl.u32 %v493, 7
        %v495 = vsub.s32 0, %v494
        %v496 = vrot.slane %v491, %v495
        %v497 = vlaneseq
        %v498 = vshrl.u32 %v497, 7
        %v499 = vsub.s32 1, %v498
        %v500 = vrot.slane %v491, %v499
        %v503 = vadd.f32 %v487, %v496
        %v504 = vadd.f32 %v488, %v500
        %v505 = vadd.f32 %v489, %v496
        %v506 = vadd.f32 %v490, %v500
        %v507 = vmax.f32 %v503, 0.0
        %v508 = vmax.f32 %v504, 0.0
        %v509 = vmax.f32 %v505, 0.0
        %v510 = vmax.f32 %v506, 0.0
        %v511 = vld [vmem:[#allocation2] sm:$0xff]
        %v512 = vld [vmem:[#allocation2 + $0x8] sm:$0xff]
        %v513 = vld [vmem:[#allocation2 + $0x10] sm:$0xff]
        %v514 = vld [vmem:[#allocation2 + $0x18] sm:$0xff]
        %v515 = vld [vmem:[#allocation2 + $0x20] sm:$0xff]
        %v516 = vld [vmem:[#allocation2 + $0x28] sm:$0xff]
        %v517 = vld [vmem:[#allocation2 + $0x30] sm:$0xff]
        %v518 = vld [vmem:[#allocation2 + $0x38] sm:$0xff]
        %v519 = vld [vmem:[#allocation2 + $0x40] sm:$0xff]
        %v520 = vld [vmem:[#allocation2 + $0x48] sm:$0xff]
        %v521 = vld [vmem:[#allocation2 + $0x50] sm:$0xff]
        %v522 = vld [vmem:[#allocation2 + $0x58] sm:$0xff]
        %v523 = vld [vmem:[#allocation2 + $0x60] sm:$0xff]
        %v524 = vld [vmem:[#allocation2 + $0x68] sm:$0xff]
        %v525 = vld [vmem:[#allocation2 + $0x70] sm:$0xff]
        %v526 = vld [vmem:[#allocation2 + $0x78] sm:$0xff]
        %v527 = vld [vmem:[#allocation2 + $0x80] sm:$0xff]
        %v528 = vld [vmem:[#allocation2 + $0x88] sm:$0xff]
        %v529 = vld [vmem:[#allocation2 + $0x90] sm:$0xff]
        %v530 = vld [vmem:[#allocation2 + $0x98] sm:$0xff]
        %v531 = vld [vmem:[#allocation2 + $0xa0] sm:$0xff]
        %v532 = vld [vmem:[#allocation2 + $0xa8] sm:$0xff]
        %v533 = vld [vmem:[#allocation2 + $0xb0] sm:$0xff]
        %v534 = vld [vmem:[#allocation2 + $0xb8] sm:$0xff]
        %v535 = vld [vmem:[#allocation2 + $0xc0] sm:$0xff]
        %v536 = vld [vmem:[#allocation2 + $0xc8] sm:$0xff]
        %v537 = vld [vmem:[#allocation2 + $0xd0] sm:$0xff]
        %v538 = vld [vmem:[#allocation2 + $0xd8] sm:$0xff]
        %v539 = vld [vmem:[#allocation2 + $0xe0] sm:$0xff]
        %v540 = vld [vmem:[#allocation2 + $0xe8] sm:$0xff]
        %v541 = vld [vmem:[#allocation2 + $0xf0] sm:$0xff]
        %v542 = vld [vmem:[#allocation2 + $0xf8] sm:$0xff]
        %v543 = vld [vmem:[#allocation2 + $0x100] sm:$0xff]
        %v544 = vld [vmem:[#allocation2 + $0x108] sm:$0xff]
        %v545 = vld [vmem:[#allocation2 + $0x110] sm:$0xff]
        %v546 = vld [vmem:[#allocation2 + $0x118] sm:$0xff]
        %v547 = vld [vmem:[#allocation2 + $0x120] sm:$0xff]
        %v548 = vld [vmem:[#allocation2 + $0x128] sm:$0xff]
        %v549 = vld [vmem:[#allocation2 + $0x130] sm:$0xff]
        %v550 = vld [vmem:[#allocation2 + $0x138] sm:$0xff]
        %v551 = vld [vmem:[#allocation2 + $0x140] sm:$0xff]
        %v552 = vld [vmem:[#allocation2 + $0x148] sm:$0xff]
        %v553 = vld [vmem:[#allocation2 + $0x150] sm:$0xff]
        %v554 = vld [vmem:[#allocation2 + $0x158] sm:$0xff]
        %v555 = vld [vmem:[#allocation2 + $0x160] sm:$0xff]
        %v556 = vld [vmem:[#allocation2 + $0x168] sm:$0xff]
        %v557 = vld [vmem:[#allocation2 + $0x170] sm:$0xff]
        %v558 = vld [vmem:[#allocation2 + $0x178] sm:$0xff]
        %v559 = vld [vmem:[#allocation2 + $0x180] sm:$0xff]
        %v560 = vld [vmem:[#allocation2 + $0x188] sm:$0xff]
        %v561 = vld [vmem:[#allocation2 + $0x190] sm:$0xff]
        %v562 = vld [vmem:[#allocation2 + $0x198] sm:$0xff]
        %v563 = vld [vmem:[#allocation2 + $0x1a0] sm:$0xff]
        %v564 = vld [vmem:[#allocation2 + $0x1a8] sm:$0xff]
        %v565 = vld [vmem:[#allocation2 + $0x1b0] sm:$0xff]
        %v566 = vld [vmem:[#allocation2 + $0x1b8] sm:$0xff]
        %v567 = vld [vmem:[#allocation2 + $0x1c0] sm:$0xff]
        %v568 = vld [vmem:[#allocation2 + $0x1c8] sm:$0xff]
        %v569 = vld [vmem:[#allocation2 + $0x1d0] sm:$0xff]
        %v570 = vld [vmem:[#allocation2 + $0x1d8] sm:$0xff]
        %v571 = vld [vmem:[#allocation2 + $0x1e0] sm:$0xff]
        %v572 = vld [vmem:[#allocation2 + $0x1e8] sm:$0xff]
        %v573 = vld [vmem:[#allocation2 + $0x1f0] sm:$0xff]
        %v574 = vld [vmem:[#allocation2 + $0x1f8] sm:$0xff]
        %v575 = vld [vmem:[%s4] sm:$0x3]
        %v577 = vlaneseq
        %v578 = vshrl.u32 %v577, 7
        %v579 = vsub.s32 0, %v578
        %v580 = vrot.slane %v575, %v579
        %v581 = vlaneseq
        %v582 = vshrl.u32 %v581, 7
        %v583 = vsub.s32 1, %v582
        %v584 = vrot.slane %v575, %v583
        %587 = vmatprep.subr.mxu0 %v512
        %588 = vmatpush1.msra.mxu0 %v511
        %589 = vmatprep.subr.mxu0 %v514
        %590 = vmatpush1.msra.mxu0 %v513
        %591 = vmatprep.subr.mxu0 %v516
        %592 = vmatpush1.msra.mxu0 %v515
        %593 = vmatprep.subr.mxu0 %v518
        %594 = vmatpush1.msra.mxu0 %v517
        %595 = vmatprep.subr.mxu0 %v520
        %596 = vmatpush1.msra.mxu0 %v519
        %597 = vmatprep.subr.mxu0 %v522
        %598 = vmatpush1.msra.mxu0 %v521
        %599 = vmatprep.subr.mxu0 %v524
        %600 = vmatpush1.msra.mxu0 %v523
        %601 = vmatprep.subr.mxu0 %v526
        %602 = vmatpush1.msra.mxu0 %v525
        %603 = vmatprep.subr.mxu0 %v528
        %604 = vmatpush1.msra.mxu0 %v527
        %605 = vmatprep.subr.mxu0 %v530
        %606 = vmatpush1.msra.mxu0 %v529
        %607 = vmatprep.subr.mxu0 %v532
        %608 = vmatpush1.msra.mxu0 %v531
        %609 = vmatprep.subr.mxu0 %v534
        %610 = vmatpush1.msra.mxu0 %v533
        %611 = vmatprep.subr.mxu0 %v536
        %612 = vmatpush1.msra.mxu0 %v535
        %613 = vmatprep.subr.mxu0 %v538
        %614 = vmatpush1.msra.mxu0 %v537
        %615 = vmatprep.subr.mxu0 %v540
        %616 = vmatpush1.msra.mxu0 %v539
        %617 = vmatprep.subr.mxu0 %v542
        %618 = vmatpush1.msra.mxu0 %v541
        %619 = vmatprep.subr.mxu0 %v544
        %620 = vmatpush1.msra.mxu0 %v543
        %621 = vmatprep.subr.mxu0 %v546
        %622 = vmatpush1.msra.mxu0 %v545
        %623 = vmatprep.subr.mxu0 %v548
        %624 = vmatpush1.msra.mxu0 %v547
        %625 = vmatprep.subr.mxu0 %v550
        %626 = vmatpush1.msra.mxu0 %v549
        %627 = vmatprep.subr.mxu0 %v552
        %628 = vmatpush1.msra.mxu0 %v551
        %629 = vmatprep.subr.mxu0 %v554
        %630 = vmatpush1.msra.mxu0 %v553
        %631 = vmatprep.subr.mxu0 %v556
        %632 = vmatpush1.msra.mxu0 %v555
        %633 = vmatprep.subr.mxu0 %v558
        %634 = vmatpush1.msra.mxu0 %v557
        %635 = vmatprep.subr.mxu0 %v560
        %636 = vmatpush1.msra.mxu0 %v559
        %637 = vmatprep.subr.mxu0 %v562
        %638 = vmatpush1.msra.mxu0 %v561
        %639 = vmatprep.subr.mxu0 %v564
        %640 = vmatpush1.msra.mxu0 %v563
        %641 = vmatprep.subr.mxu0 %v566
        %642 = vmatpush1.msra.mxu0 %v565
        %643 = vmatprep.subr.mxu0 %v568
        %644 = vmatpush1.msra.mxu0 %v567
        %645 = vmatprep.subr.mxu0 %v570
        %646 = vmatpush1.msra.mxu0 %v569
        %647 = vmatprep.subr.mxu0 %v572
        %648 = vmatpush1.msra.mxu0 %v571
        %649 = vmatprep.subr.mxu0 %v574
        %650 = vmatpush1.msra.mxu0 %v573
        %651 = vmatprep.mubr.f32.mxu0 %v508
        %652 = vmatmul.mubr.f32.gmra.mrb[0].mxu0 %v507
        %v653 = vpop.f32.mrb[0].mxu0
        %v654 = vadd.f32 %v580, %v653
        %v655 = vpop.f32.mrb[0].mxu0
        %v656 = vadd.f32 %v584, %v655
        %657 = vmatprep.mubr.f32.mxu0 %v510
        %658 = vmatmul.mubr.f32.gmra.mrb[0].mxu0 %v509
        %v659 = vpop.f32.mrb[0].mxu0
        %v660 = vadd.f32 %v580, %v659
        %v661 = vpop.f32.mrb[0].mxu0
        %v662 = vadd.f32 %v584, %v661
        %663 = vdwg.mxu0
        %v664 = vmax.f32 %v654, 0.0
        %v665 = vmax.f32 %v656, 0.0
        %v666 = vmax.f32 %v660, 0.0
        %v667 = vmax.f32 %v662, 0.0
        %v668 = vld [vmem:[#allocation4] sm:$0xff]
        %v669 = vld [vmem:[#allocation4 + $0x8] sm:$0xff]
        %v670 = vld [vmem:[#allocation4 + $0x10] sm:$0xff]
        %v671 = vld [vmem:[#allocation4 + $0x18] sm:$0xff]
        %v672 = vld [vmem:[#allocation4 + $0x20] sm:$0xff]
        %v673 = vld [vmem:[#allocation4 + $0x28] sm:$0xff]
        %v674 = vld [vmem:[#allocation4 + $0x30] sm:$0xff]
        %v675 = vld [vmem:[#allocation4 + $0x38] sm:$0xff]
        %v676 = vld [vmem:[#allocation4 + $0x40] sm:$0xff]
        %v677 = vld [vmem:[#allocation4 + $0x48] sm:$0xff]
        %v678 = vld [vmem:[#allocation4 + $0x50] sm:$0xff]
        %v679 = vld [vmem:[#allocation4 + $0x58] sm:$0xff]
        %v680 = vld [vmem:[#allocation4 + $0x60] sm:$0xff]
        %v681 = vld [vmem:[#allocation4 + $0x68] sm:$0xff]
        %v682 = vld [vmem:[#allocation4 + $0x70] sm:$0xff]
        %v683 = vld [vmem:[#allocation4 + $0x78] sm:$0xff]
        %v684 = vld [vmem:[#allocation4 + $0x80] sm:$0xff]
        %v685 = vld [vmem:[#allocation4 + $0x88] sm:$0xff]
        %v686 = vld [vmem:[#allocation4 + $0x90] sm:$0xff]
        %v687 = vld [vmem:[#allocation4 + $0x98] sm:$0xff]
        %v688 = vld [vmem:[#allocation4 + $0xa0] sm:$0xff]
        %v689 = vld [vmem:[#allocation4 + $0xa8] sm:$0xff]
        %v690 = vld [vmem:[#allocation4 + $0xb0] sm:$0xff]
        %v691 = vld [vmem:[#allocation4 + $0xb8] sm:$0xff]
        %v692 = vld [vmem:[#allocation4 + $0xc0] sm:$0xff]
        %v693 = vld [vmem:[#allocation4 + $0xc8] sm:$0xff]
        %v694 = vld [vmem:[#allocation4 + $0xd0] sm:$0xff]
        %v695 = vld [vmem:[#allocation4 + $0xd8] sm:$0xff]
        %v696 = vld [vmem:[#allocation4 + $0xe0] sm:$0xff]
        %v697 = vld [vmem:[#allocation4 + $0xe8] sm:$0xff]
        %v698 = vld [vmem:[#allocation4 + $0xf0] sm:$0xff]
        %v699 = vld [vmem:[#allocation4 + $0xf8] sm:$0xff]
        %v700 = vld [vmem:[#allocation4 + $0x100] sm:$0xff]
        %v701 = vld [vmem:[#allocation4 + $0x108] sm:$0xff]
        %v702 = vld [vmem:[#allocation4 + $0x110] sm:$0xff]
        %v703 = vld [vmem:[#allocation4 + $0x118] sm:$0xff]
        %v704 = vld [vmem:[#allocation4 + $0x120] sm:$0xff]
        %v705 = vld [vmem:[#allocation4 + $0x128] sm:$0xff]
        %v706 = vld [vmem:[#allocation4 + $0x130] sm:$0xff]
        %v707 = vld [vmem:[#allocation4 + $0x138] sm:$0xff]
        %v708 = vld [vmem:[#allocation4 + $0x140] sm:$0xff]
        %v709 = vld [vmem:[#allocation4 + $0x148] sm:$0xff]
        %v710 = vld [vmem:[#allocation4 + $0x150] sm:$0xff]
        %v711 = vld [vmem:[#allocation4 + $0x158] sm:$0xff]
        %v712 = vld [vmem:[#allocation4 + $0x160] sm:$0xff]
        %v713 = vld [vmem:[#allocation4 + $0x168] sm:$0xff]
        %v714 = vld [vmem:[#allocation4 + $0x170] sm:$0xff]
        %v715 = vld [vmem:[#allocation4 + $0x178] sm:$0xff]
        %v716 = vld [vmem:[#allocation4 + $0x180] sm:$0xff]
        %v717 = vld [vmem:[#allocation4 + $0x188] sm:$0xff]
        %v718 = vld [vmem:[#allocation4 + $0x190] sm:$0xff]
        %v719 = vld [vmem:[#allocation4 + $0x198] sm:$0xff]
        %v720 = vld [vmem:[#allocation4 + $0x1a0] sm:$0xff]
        %v721 = vld [vmem:[#allocation4 + $0x1a8] sm:$0xff]
        %v722 = vld [vmem:[#allocation4 + $0x1b0] sm:$0xff]
        %v723 = vld [vmem:[#allocation4 + $0x1b8] sm:$0xff]
        %v724 = vld [vmem:[#allocation4 + $0x1c0] sm:$0xff]
        %v725 = vld [vmem:[#allocation4 + $0x1c8] sm:$0xff]
        %v726 = vld [vmem:[#allocation4 + $0x1d0] sm:$0xff]
        %v727 = vld [vmem:[#allocation4 + $0x1d8] sm:$0xff]
        %v728 = vld [vmem:[#allocation4 + $0x1e0] sm:$0xff]
        %v729 = vld [vmem:[#allocation4 + $0x1e8] sm:$0xff]
        %v730 = vld [vmem:[#allocation4 + $0x1f0] sm:$0xff]
        %v731 = vld [vmem:[#allocation4 + $0x1f8] sm:$0xff]
        %v732 = vld [vmem:[%s6] sm:$0x3]
        %v734 = vlaneseq
        %v735 = vshrl.u32 %v734, 7
        %v736 = vsub.s32 0, %v735
        %v737 = vrot.slane %v732, %v736
        %v738 = vlaneseq
        %v739 = vshrl.u32 %v738, 7
        %v740 = vsub.s32 1, %v739
        %v741 = vrot.slane %v732, %v740
        %744 = vmatprep.subr.mxu0 %v669
        %745 = vmatpush1.msra.mxu0 %v668
        %746 = vmatprep.subr.mxu0 %v671
        %747 = vmatpush1.msra.mxu0 %v670
        %748 = vmatprep.subr.mxu0 %v673
        %749 = vmatpush1.msra.mxu0 %v672
        %750 = vmatprep.subr.mxu0 %v675
        %751 = vmatpush1.msra.mxu0 %v674
        %752 = vmatprep.subr.mxu0 %v677
        %753 = vmatpush1.msra.mxu0 %v676
        %754 = vmatprep.subr.mxu0 %v679
        %755 = vmatpush1.msra.mxu0 %v678
        %756 = vmatprep.subr.mxu0 %v681
        %757 = vmatpush1.msra.mxu0 %v680
        %758 = vmatprep.subr.mxu0 %v683
        %759 = vmatpush1.msra.mxu0 %v682
        %760 = vmatprep.subr.mxu0 %v685
        %761 = vmatpush1.msra.mxu0 %v684
        %762 = vmatprep.subr.mxu0 %v687
        %763 = vmatpush1.msra.mxu0 %v686
        %764 = vmatprep.subr.mxu0 %v689
        %765 = vmatpush1.msra.mxu0 %v688
        %766 = vmatprep.subr.mxu0 %v691
        %767 = vmatpush1.msra.mxu0 %v690
        %768 = vmatprep.subr.mxu0 %v693
        %769 = vmatpush1.msra.mxu0 %v692
        %770 = vmatprep.subr.mxu0 %v695
        %771 = vmatpush1.msra.mxu0 %v694
        %772 = vmatprep.subr.mxu0 %v697
        %773 = vmatpush1.msra.mxu0 %v696
        %774 = vmatprep.subr.mxu0 %v699
        %775 = vmatpush1.msra.mxu0 %v698
        %776 = vmatprep.subr.mxu0 %v701
        %777 = vmatpush1.msra.mxu0 %v700
        %778 = vmatprep.subr.mxu0 %v703
        %779 = vmatpush1.msra.mxu0 %v702
        %780 = vmatprep.subr.mxu0 %v705
        %781 = vmatpush1.msra.mxu0 %v704
        %782 = vmatprep.subr.mxu0 %v707
        %783 = vmatpush1.msra.mxu0 %v706
        %784 = vmatprep.subr.mxu0 %v709
        %785 = vmatpush1.msra.mxu0 %v708
        %786 = vmatprep.subr.mxu0 %v711
        %787 = vmatpush1.msra.mxu0 %v710
        %788 = vmatprep.subr.mxu0 %v713
        %789 = vmatpush1.msra.mxu0 %v712
        %790 = vmatprep.subr.mxu0 %v715
        %791 = vmatpush1.msra.mxu0 %v714
        %792 = vmatprep.subr.mxu0 %v717
        %793 = vmatpush1.msra.mxu0 %v716
        %794 = vmatprep.subr.mxu0 %v719
        %795 = vmatpush1.msra.mxu0 %v718
        %796 = vmatprep.subr.mxu0 %v721
        %797 = vmatpush1.msra.mxu0 %v720
        %798 = vmatprep.subr.mxu0 %v723
        %799 = vmatpush1.msra.mxu0 %v722
        %800 = vmatprep.subr.mxu0 %v725
        %801 = vmatpush1.msra.mxu0 %v724
        %802 = vmatprep.subr.mxu0 %v727
        %803 = vmatpush1.msra.mxu0 %v726
        %804 = vmatprep.subr.mxu0 %v729
        %805 = vmatpush1.msra.mxu0 %v728
        %806 = vmatprep.subr.mxu0 %v731
        %807 = vmatpush1.msra.mxu0 %v730
        %808 = vmatprep.mubr.f32.mxu0 %v665
        %809 = vmatmul.mubr.f32.gmra.mrb[0].mxu0 %v664
        %v810 = vpop.f32.mrb[0].mxu0
        %v811 = vadd.f32 %v737, %v810
        %v812 = vpop.f32.mrb[0].mxu0
        %v813 = vadd.f32 %v741, %v812
        %814 = vmatprep.mubr.f32.mxu0 %v667
        %815 = vmatmul.mubr.f32.gmra.mrb[0].mxu0 %v666
        %v816 = vpop.f32.mrb[0].mxu0
        %v817 = vadd.f32 %v737, %v816
        %v818 = vpop.f32.mrb[0].mxu0
        %v819 = vadd.f32 %v741, %v818
        %820 = vdwg.mxu0
        %v821 = vmax.f32 %v811, 0.0
        %v822 = vmax.f32 %v813, 0.0
        %v823 = vmax.f32 %v817, 0.0
        %v824 = vmax.f32 %v819, 0.0
        %v825 = vld [vmem:[#allocation6] sm:$0xff]
        %v826 = vld [vmem:[#allocation6 + $0x8] sm:$0xff]
        %v827 = vld [vmem:[#allocation6 + $0x10] sm:$0xff]
        %v828 = vld [vmem:[#allocation6 + $0x18] sm:$0xff]
        %v829 = vld [vmem:[#allocation6 + $0x20] sm:$0xff]
        %v830 = vld [vmem:[#allocation6 + $0x28] sm:$0xff]
        %v831 = vld [vmem:[#allocation6 + $0x30] sm:$0xff]
        %v832 = vld [vmem:[#allocation6 + $0x38] sm:$0xff]
        %v833 = vld [vmem:[#allocation6 + $0x40] sm:$0xff]
        %v834 = vld [vmem:[#allocation6 + $0x48] sm:$0xff]
        %v835 = vld [vmem:[#allocation6 + $0x50] sm:$0xff]
        %v836 = vld [vmem:[#allocation6 + $0x58] sm:$0xff]
        %v837 = vld [vmem:[#allocation6 + $0x60] sm:$0xff]
        %v838 = vld [vmem:[#allocation6 + $0x68] sm:$0xff]
        %v839 = vld [vmem:[#allocation6 + $0x70] sm:$0xff]
        %v840 = vld [vmem:[#allocation6 + $0x78] sm:$0xff]
        %v841 = vld [vmem:[#allocation6 + $0x80] sm:$0xff]
        %v842 = vld [vmem:[#allocation6 + $0x88] sm:$0xff]
        %v843 = vld [vmem:[#allocation6 + $0x90] sm:$0xff]
        %v844 = vld [vmem:[#allocation6 + $0x98] sm:$0xff]
        %v845 = vld [vmem:[#allocation6 + $0xa0] sm:$0xff]
        %v846 = vld [vmem:[#allocation6 + $0xa8] sm:$0xff]
        %v847 = vld [vmem:[#allocation6 + $0xb0] sm:$0xff]
        %v848 = vld [vmem:[#allocation6 + $0xb8] sm:$0xff]
        %v849 = vld [vmem:[#allocation6 + $0xc0] sm:$0xff]
        %v850 = vld [vmem:[#allocation6 + $0xc8] sm:$0xff]
        %v851 = vld [vmem:[#allocation6 + $0xd0] sm:$0xff]
        %v852 = vld [vmem:[#allocation6 + $0xd8] sm:$0xff]
        %v853 = vld [vmem:[#allocation6 + $0xe0] sm:$0xff]
        %v854 = vld [vmem:[#allocation6 + $0xe8] sm:$0xff]
        %v855 = vld [vmem:[#allocation6 + $0xf0] sm:$0xff]
        %v856 = vld [vmem:[#allocation6 + $0xf8] sm:$0xff]
        %v857 = vld [vmem:[#allocation6 + $0x100] sm:$0xff]
        %v858 = vld [vmem:[#allocation6 + $0x108] sm:$0xff]
        %v859 = vld [vmem:[#allocation6 + $0x110] sm:$0xff]
        %v860 = vld [vmem:[#allocation6 + $0x118] sm:$0xff]
        %v861 = vld [vmem:[#allocation6 + $0x120] sm:$0xff]
        %v862 = vld [vmem:[#allocation6 + $0x128] sm:$0xff]
        %v863 = vld [vmem:[#allocation6 + $0x130] sm:$0xff]
        %v864 = vld [vmem:[#allocation6 + $0x138] sm:$0xff]
        %v865 = vld [vmem:[#allocation6 + $0x140] sm:$0xff]
        %v866 = vld [vmem:[#allocation6 + $0x148] sm:$0xff]
        %v867 = vld [vmem:[#allocation6 + $0x150] sm:$0xff]
        %v868 = vld [vmem:[#allocation6 + $0x158] sm:$0xff]
        %v869 = vld [vmem:[#allocation6 + $0x160] sm:$0xff]
        %v870 = vld [vmem:[#allocation6 + $0x168] sm:$0xff]
        %v871 = vld [vmem:[#allocation6 + $0x170] sm:$0xff]
        %v872 = vld [vmem:[#allocation6 + $0x178] sm:$0xff]
        %v873 = vld [vmem:[#allocation6 + $0x180] sm:$0xff]
        %v874 = vld [vmem:[#allocation6 + $0x188] sm:$0xff]
        %v875 = vld [vmem:[#allocation6 + $0x190] sm:$0xff]
        %v876 = vld [vmem:[#allocation6 + $0x198] sm:$0xff]
        %v877 = vld [vmem:[#allocation6 + $0x1a0] sm:$0xff]
        %v878 = vld [vmem:[#allocation6 + $0x1a8] sm:$0xff]
        %v879 = vld [vmem:[#allocation6 + $0x1b0] sm:$0xff]
        %v880 = vld [vmem:[#allocation6 + $0x1b8] sm:$0xff]
        %v881 = vld [vmem:[#allocation6 + $0x1c0] sm:$0xff]
        %v882 = vld [vmem:[#allocation6 + $0x1c8] sm:$0xff]
        %v883 = vld [vmem:[#allocation6 + $0x1d0] sm:$0xff]
        %v884 = vld [vmem:[#allocation6 + $0x1d8] sm:$0xff]
        %v885 = vld [vmem:[#allocation6 + $0x1e0] sm:$0xff]
        %v886 = vld [vmem:[#allocation6 + $0x1e8] sm:$0xff]
        %v887 = vld [vmem:[#allocation6 + $0x1f0] sm:$0xff]
        %v888 = vld [vmem:[#allocation6 + $0x1f8] sm:$0xff]
        %v889 = vld [vmem:[%s8] sm:$0x3]
        %v891 = vlaneseq
        %v892 = vshrl.u32 %v891, 7
        %v893 = vsub.s32 0, %v892
        %v894 = vrot.slane %v889, %v893
        %v895 = vlaneseq
        %v896 = vshrl.u32 %v895, 7
        %v897 = vsub.s32 1, %v896
        %v898 = vrot.slane %v889, %v897
        %901 = vmatprep.subr.mxu0 %v826
        %902 = vmatpush1.msra.mxu0 %v825
        %903 = vmatprep.subr.mxu0 %v828
        %904 = vmatpush1.msra.mxu0 %v827
        %905 = vmatprep.subr.mxu0 %v830
        %906 = vmatpush1.msra.mxu0 %v829
        %907 = vmatprep.subr.mxu0 %v832
        %908 = vmatpush1.msra.mxu0 %v831
        %909 = vmatprep.subr.mxu0 %v834
        %910 = vmatpush1.msra.mxu0 %v833
        %911 = vmatprep.subr.mxu0 %v836
        %912 = vmatpush1.msra.mxu0 %v835
        %913 = vmatprep.subr.mxu0 %v838
        %914 = vmatpush1.msra.mxu0 %v837
        %915 = vmatprep.subr.mxu0 %v840
        %916 = vmatpush1.msra.mxu0 %v839
        %917 = vmatprep.subr.mxu0 %v842
        %918 = vmatpush1.msra.mxu0 %v841
        %919 = vmatprep.subr.mxu0 %v844
        %920 = vmatpush1.msra.mxu0 %v843
        %921 = vmatprep.subr.mxu0 %v846
        %922 = vmatpush1.msra.mxu0 %v845
        %923 = vmatprep.subr.mxu0 %v848
        %924 = vmatpush1.msra.mxu0 %v847
        %925 = vmatprep.subr.mxu0 %v850
        %926 = vmatpush1.msra.mxu0 %v849
        %927 = vmatprep.subr.mxu0 %v852
        %928 = vmatpush1.msra.mxu0 %v851
        %929 = vmatprep.subr.mxu0 %v854
        %930 = vmatpush1.msra.mxu0 %v853
        %931 = vmatprep.subr.mxu0 %v856
        %932 = vmatpush1.msra.mxu0 %v855
        %933 = vmatprep.subr.mxu0 %v858
        %934 = vmatpush1.msra.mxu0 %v857
        %935 = vmatprep.subr.mxu0 %v860
        %936 = vmatpush1.msra.mxu0 %v859
        %937 = vmatprep.subr.mxu0 %v862
        %938 = vmatpush1.msra.mxu0 %v861
        %939 = vmatprep.subr.mxu0 %v864
        %940 = vmatpush1.msra.mxu0 %v863
        %941 = vmatprep.subr.mxu0 %v866
        %942 = vmatpush1.msra.mxu0 %v865
        %943 = vmatprep.subr.mxu0 %v868
        %944 = vmatpush1.msra.mxu0 %v867
        %945 = vmatprep.subr.mxu0 %v870
        %946 = vmatpush1.msra.mxu0 %v869
        %947 = vmatprep.subr.mxu0 %v872
        %948 = vmatpush1.msra.mxu0 %v871
        %949 = vmatprep.subr.mxu0 %v874
        %950 = vmatpush1.msra.mxu0 %v873
        %951 = vmatprep.subr.mxu0 %v876
        %952 = vmatpush1.msra.mxu0 %v875
        %953 = vmatprep.subr.mxu0 %v878
        %954 = vmatpush1.msra.mxu0 %v877
        %955 = vmatprep.subr.mxu0 %v880
        %956 = vmatpush1.msra.mxu0 %v879
        %957 = vmatprep.subr.mxu0 %v882
        %958 = vmatpush1.msra.mxu0 %v881
        %959 = vmatprep.subr.mxu0 %v884
        %960 = vmatpush1.msra.mxu0 %v883
        %961 = vmatprep.subr.mxu0 %v886
        %962 = vmatpush1.msra.mxu0 %v885
        %963 = vmatprep.subr.mxu0 %v888
        %964 = vmatpush1.msra.mxu0 %v887
        %965 = vmatprep.mubr.f32.mxu0 %v822
        %966 = vmatmul.mubr.f32.gmra.mrb[0].mxu0 %v821
        %v967 = vpop.f32.mrb[0].mxu0
        %v968 = vadd.f32 %v894, %v967
        %v969 = vpop.f32.mrb[0].mxu0
        %v970 = vadd.f32 %v898, %v969
        %971 = vmatprep.mubr.f32.mxu0 %v824
        %972 = vmatmul.mubr.f32.gmra.mrb[0].mxu0 %v823
        %v973 = vpop.f32.mrb[0].mxu0
        %v974 = vadd.f32 %v894, %v973
        %v975 = vpop.f32.mrb[0].mxu0
        %v976 = vadd.f32 %v898, %v975
        %977 = vdwg.mxu0
        %v978 = vmax.f32 %v968, 0.0
        %v979 = vmax.f32 %v970, 0.0
        %v980 = vmax.f32 %v974, 0.0
        %v981 = vmax.f32 %v976, 0.0
        %v982 = vld [vmem:[%s9] sm:$0xff]
        %v983 = vld [vmem:[%s9 + $0x8] sm:$0xff]
        %v984 = vld [vmem:[%s9 + $0x10] sm:$0xff]
        %v985 = vld [vmem:[%s9 + $0x18] sm:$0xff]
        %v986 = vld [vmem:[%s9 + $0x20] sm:$0xff]
        %v987 = vld [vmem:[%s9 + $0x28] sm:$0xff]
        %v988 = vld [vmem:[%s9 + $0x30] sm:$0xff]
        %v989 = vld [vmem:[%s9 + $0x38] sm:$0xff]
        %v990 = vld [vmem:[%s9 + $0x40] sm:$0xff]
        %v991 = vld [vmem:[%s9 + $0x48] sm:$0xff]
        %v992 = vld [vmem:[%s9 + $0x50] sm:$0xff]
        %v993 = vld [vmem:[%s9 + $0x58] sm:$0xff]
        %v994 = vld [vmem:[%s9 + $0x60] sm:$0xff]
        %v995 = vld [vmem:[%s9 + $0x68] sm:$0xff]
        %v996 = vld [vmem:[%s9 + $0x70] sm:$0xff]
        %v997 = vld [vmem:[%s9 + $0x78] sm:$0xff]
        %v998 = vld [vmem:[%s9 + $0x80] sm:$0xff]
        %v999 = vld [vmem:[%s9 + $0x88] sm:$0xff]
        %v1000 = vld [vmem:[%s9 + $0x90] sm:$0xff]
        %v1001 = vld [vmem:[%s9 + $0x98] sm:$0xff]
        %v1002 = vld [vmem:[%s9 + $0xa0] sm:$0xff]
        %v1003 = vld [vmem:[%s9 + $0xa8] sm:$0xff]
        %v1004 = vld [vmem:[%s9 + $0xb0] sm:$0xff]
        %v1005 = vld [vmem:[%s9 + $0xb8] sm:$0xff]
        %v1006 = vld [vmem:[%s9 + $0xc0] sm:$0xff]
        %v1007 = vld [vmem:[%s9 + $0xc8] sm:$0xff]
        %v1008 = vld [vmem:[%s9 + $0xd0] sm:$0xff]
        %v1009 = vld [vmem:[%s9 + $0xd8] sm:$0xff]
        %v1010 = vld [vmem:[%s9 + $0xe0] sm:$0xff]
        %v1011 = vld [vmem:[%s9 + $0xe8] sm:$0xff]
        %v1012 = vld [vmem:[%s9 + $0xf0] sm:$0xff]
        %v1013 = vld [vmem:[%s9 + $0xf8] sm:$0xff]
        %v1014 = vld [vmem:[%s10] sm:$0x1]
        %v1016 = vlaneseq
        %v1017 = vshrl.u32 %v1016, 7
        %v1018 = vsub.s32 0, %v1017
        %v1019 = vrot.slane %v1014, %v1018
        %1021 = vmatprep.subr.mxu0 0.0
        %1022 = vmatpush1.msra.mxu0 %v982
        %1023 = vmatprep.subr.mxu0 0.0
        %1024 = vmatpush1.msra.mxu0 %v983
        %1025 = vmatprep.subr.mxu0 0.0
        %1026 = vmatpush1.msra.mxu0 %v984
        %1027 = vmatprep.subr.mxu0 0.0
        %1028 = vmatpush1.msra.mxu0 %v985
        %1029 = vmatprep.subr.mxu0 0.0
        %1030 = vmatpush1.msra.mxu0 %v986
        %1031 = vmatprep.subr.mxu0 0.0
        %1032 = vmatpush1.msra.mxu0 %v987
        %1033 = vmatprep.subr.mxu0 0.0
        %1034 = vmatpush1.msra.mxu0 %v988
        %1035 = vmatprep.subr.mxu0 0.0
        %1036 = vmatpush1.msra.mxu0 %v989
        %1037 = vmatprep.subr.mxu0 0.0
        %1038 = vmatpush1.msra.mxu0 %v990
        %1039 = vmatprep.subr.mxu0 0.0
        %1040 = vmatpush1.msra.mxu0 %v991
        %1041 = vmatprep.subr.mxu0 0.0
        %1042 = vmatpush1.msra.mxu0 %v992
        %1043 = vmatprep.subr.mxu0 0.0
        %1044 = vmatpush1.msra.mxu0 %v993
        %1045 = vmatprep.subr.mxu0 0.0
        %1046 = vmatpush1.msra.mxu0 %v994
        %1047 = vmatprep.subr.mxu0 0.0
        %1048 = vmatpush1.msra.mxu0 %v995
        %1049 = vmatprep.subr.mxu0 0.0
        %1050 = vmatpush1.msra.mxu0 %v996
        %1051 = vmatprep.subr.mxu0 0.0
        %1052 = vmatpush1.msra.mxu0 %v997
        %1053 = vmatprep.subr.mxu0 0.0
        %1054 = vmatpush1.msra.mxu0 %v998
        %1055 = vmatprep.subr.mxu0 0.0
        %1056 = vmatpush1.msra.mxu0 %v999
        %1057 = vmatprep.subr.mxu0 0.0
        %1058 = vmatpush1.msra.mxu0 %v1000
        %1059 = vmatprep.subr.mxu0 0.0
        %1060 = vmatpush1.msra.mxu0 %v1001
        %1061 = vmatprep.subr.mxu0 0.0
        %1062 = vmatpush1.msra.mxu0 %v1002
        %1063 = vmatprep.subr.mxu0 0.0
        %1064 = vmatpush1.msra.mxu0 %v1003
        %1065 = vmatprep.subr.mxu0 0.0
        %1066 = vmatpush1.msra.mxu0 %v1004
        %1067 = vmatprep.subr.mxu0 0.0
        %1068 = vmatpush1.msra.mxu0 %v1005
        %1069 = vmatprep.subr.mxu0 0.0
        %1070 = vmatpush1.msra.mxu0 %v1006
        %1071 = vmatprep.subr.mxu0 0.0
        %1072 = vmatpush1.msra.mxu0 %v1007
        %1073 = vmatprep.subr.mxu0 0.0
        %1074 = vmatpush1.msra.mxu0 %v1008
        %1075 = vmatprep.subr.mxu0 0.0
        %1076 = vmatpush1.msra.mxu0 %v1009
        %1077 = vmatprep.subr.mxu0 0.0
        %1078 = vmatpush1.msra.mxu0 %v1010
        %1079 = vmatprep.subr.mxu0 0.0
        %1080 = vmatpush1.msra.mxu0 %v1011
        %1081 = vmatprep.subr.mxu0 0.0
        %1082 = vmatpush1.msra.mxu0 %v1012
        %1083 = vmatprep.subr.mxu0 0.0
        %1084 = vmatpush1.msra.mxu0 %v1013
        %1085 = vmatprep.mubr.f32.mxu0 %v979
        %1086 = vmatmul.mubr.f32.gmra.mrb[0].mxu0 %v978
        %v1087 = vpop.f32.mrb[0].mxu0
        %v1088 = vadd.f32 %v1019, %v1087
        %v1089 = vpop.f32.mrb[0].mxu0
        %1090 = vmatprep.mubr.f32.mxu0 %v981
        %1091 = vmatmul.mubr.f32.gmra.mrb[0].mxu0 %v980
        %v1092 = vpop.f32.mrb[0].mxu0
        %v1093 = vadd.f32 %v1019, %v1092
        %v1094 = vpop.f32.mrb[0].mxu0
        %1095 = vdwg.mxu0
        %vm1096 = vcmask 15360
        %1097 = vst.msk [vmem:[%s432] sm:$0xff] %vm1096, %v1088
        %1098 = vst.msk [vmem:[%s432 + $0x8] sm:$0xff] %vm1096, %v1093
        %s1099 = smul.u32 2, %s24
        %p1100 = scmp.lt.s32.totalorder %s1099, 7
        %s1101 = scalar_select %p1100, %s1099, 7
        %s1102 = smul.addr %s1101, 8
        %s1103 = scalar_lea.vmem %s11, %s1102
        // Predicated region
        $region77: #{tpu_custom_call.1} parent=63 // pred_check
          %p1104 = pneg %p278
        $region78: #{tpu_custom_call.1} parent=63 // pred_check_branch
          %1106 = sbr.rel (%p1104) target = $region80
        $region79: #{tpu_custom_call.1} parent=63 // pred_region
          %s1107 = smul.u32 2, %s24
        $region80: #{tpu_custom_call.1} parent=63 // pred_fallthru
          _
      $region64: #{tpu_custom_call.1} parent=5 // pred_fallthru
        _
      %p1108 = scmp.le.s32.totalorder 2, %s19
      // Predicated region
      $region81: #{tpu_custom_call.1} parent=5 // pred_check
        %p1109 = pneg %p1108
      $region82: #{tpu_custom_call.1} parent=5 // pred_check_branch
        %1111 = sbr.rel (%p1109) target = $region84
      $region83: #{tpu_custom_call.1} parent=5 // pred_region
        %s1112 = ssub.s32 %s19, 2
        // Predicated region
        $region85: #{tpu_custom_call.1} parent=83 // pred_check
          %p1113 = pneg %p284
        $region86: #{tpu_custom_call.1} parent=83 // pred_check_branch
          %1115 = sbr.rel (%p1113) target = $region88
        $region87: #{tpu_custom_call.1} parent=83 // pred_region
          %s1116 = smul.u32 2, %s25
          %p1117 = scmp.lt.s32.totalorder %s1116, 7
          %s1118 = scalar_select %p1117, %s1116, 7
          %s1119 = smul.addr %s1118, 8
          %s1120 = scalar_lea.vmem %s11, %s1119
        $region88: #{tpu_custom_call.1} parent=83 // pred_fallthru
          _
      $region84: #{tpu_custom_call.1} parent=5 // pred_fallthru
        _
    $region6: #{tpu_custom_call.1} parent=1 // loop_footer
      %s23 = sadd.s32 1, %s19
    $region7: #{tpu_custom_call.1} parent=1 // loop_footer_branch
      %18 = sbr.rel target = $region3
    $region8: #{tpu_custom_call.1} parent=1 // loop_exit
      _
    %1121 = vsyncpa [#allocation3], 1
    %s1122 = scalar_lea.sflag [#allocation3], 1
    %1123 = vsyncpa %s1122, 1
    %1124 = vsyncpa [#allocation5], 1

</llo_original>
